<compile_context>
chip_gen: v5e
topology: v5e:2x2
jax: 0.10.0
libtpu: 0.0.40
codegen_flags: <defaults>
</compile_context>

<pallas_src>
import jax
import jax.numpy as jnp
from jax.experimental import pallas as pl
from jax.experimental.pallas import tpu as pltpu


# ---------------------------------------------------------------------------
# In-kernel gate: k-tap "same" channel conv on the pooled column + sigmoid.
# ---------------------------------------------------------------------------
def _channel_conv_gate(w_ref, y, C, pad, k_size):
    """y: (C, 1) f32 pooled means.  Returns the (C, 1) f32 sigmoid gate.

    conv[c] = sum_t w[t] * y[c + t - pad]   with zero padding outside [0, C).
    """
    if C % 8 == 0:
        # Hot path: k sublane rolls + iota mask.  O(k*C), no 2-D intermediates.
        ch = jax.lax.broadcasted_iota(jnp.int32, (C, 1), 0)
        conv = jnp.zeros((C, 1), jnp.float32)
        for t in range(k_size):
            d = t - pad                                   # read y[c + d]
            if d == 0:
                conv = conv + w_ref[t] * y
                continue
            rolled = pltpu.roll(y, shift=(-d) % C, axis=0)  # rolled[c] = y[(c+d)%C]
            valid = jnp.logical_and(ch + d >= 0, ch + d < C)
            conv = conv + w_ref[t] * jnp.where(valid, rolled, 0.0)
        return jax.nn.sigmoid(conv)

    # Fallback for tiny / non-sublane-aligned C (toy shapes): one (C, C) iota,
    # k wheres into a band matrix, diagonal reused for the row->column move.
    # TODO(synk): large C that is not a multiple of 8 would pay O(C^2) here;
    # not a realistic ECA configuration.
    tap = (jax.lax.broadcasted_iota(jnp.int32, (C, C), 0)
           - jax.lax.broadcasted_iota(jnp.int32, (C, C), 1) + pad)
    A = jnp.zeros((C, C), jnp.float32)
    for t in range(k_size):
        A = jnp.where(tap == t, w_ref[t], A)              # A[i, j] = w[i - j + pad]
    row = jnp.sum(A * y, axis=0, keepdims=True)           # (1, C): conv result
    gate_row = jax.nn.sigmoid(row)
    # Move back to a column using the already-built diagonal mask (tap == pad).
    return jnp.sum(jnp.where(tap == pad, gate_row, 0.0), axis=1, keepdims=True)


# ---------------------------------------------------------------------------
# Single-pass kernel: one (C, HW) tile per batch element (pool + gate + mul).
# ---------------------------------------------------------------------------
def _single_pass_kernel(C, HW, pad, k_size):
    inv_hw = 1.0 / float(HW)

    def kernel(w_ref, x_ref, o_ref):
        # w_ref : (k_size,) f32 conv taps (SMEM scalars)
        # x_ref : (C, HW) input tile, lane axis = HW
        # o_ref : (C, HW) output tile
        x = x_ref[...]
        # Global average pool over the spatial (lane) axis, f32 accumulation
        # (no full-tile f32 copy is materialised for low-precision inputs).
        y = jnp.sum(x, axis=1, keepdims=True, dtype=jnp.float32) * inv_hw
        gate = _channel_conv_gate(w_ref, y, C, pad, k_size)       # (C, 1) f32
        # Per-channel gating multiply in the input dtype (broadcast over lanes).
        o_ref[...] = (x * gate.astype(x.dtype)).astype(o_ref.dtype)

    return kernel


# ---------------------------------------------------------------------------
# Two-pass fallback kernels (bounded VMEM footprint, more grid parallelism).
# ---------------------------------------------------------------------------
def _pool_gate_kernel(C, HW, pad, k_size):
    inv_hw = 1.0 / float(HW)

    def kernel(w_ref, x_ref, g_ref, acc_ref):
        h = pl.program_id(1)

        @pl.when(h == 0)
        def _():
            acc_ref[...] = jnp.zeros_like(acc_ref)

        acc_ref[...] += jnp.sum(x_ref[...], axis=1, keepdims=True,
                                dtype=jnp.float32)

        @pl.when(h == pl.num_programs(1) - 1)
        def _():
            y = acc_ref[...] * inv_hw
            g_ref[...] = _channel_conv_gate(w_ref, y, C, pad, k_size)

    return kernel


def _gating_kernel(x_ref, g_ref, o_ref):
    x = x_ref[...]
    o_ref[...] = (x * g_ref[...].astype(x.dtype)).astype(o_ref.dtype)


def _pick_block(dim, target, multiple):
    """Largest divisor of `dim` that is <= target and a multiple of `multiple`;
    falls back to the full dim (always a legal block size)."""
    if dim <= target:
        return dim
    for d in range(min(target, dim), 0, -1):
        if dim % d == 0 and d % multiple == 0:
            return d
    # TODO(synk): ragged HW/C with no aligned divisor keeps the full dim; fine
    # for correctness, may re-trigger the large-tile case it tried to avoid.
    return dim


# ---------------------------------------------------------------------------
# Wrapper
# ---------------------------------------------------------------------------
def eca_forward(x, conv_w, k_size=3):
    """ECA forward. x: (B, C, H, W); conv_w: (1, 1, k_size) Conv1d weight, no bias."""
    B, C, H, W = x.shape
    HW = H * W
    pad = (k_size - 1) // 2
    w = conv_w.reshape(k_size).astype(jnp.float32)
    itemsize = jnp.dtype(x.dtype).itemsize

    # Lane-dense view (B, C, H*W): metadata-only reshape, no data movement.
    # TODO(synk): for deep stages (HW = 49/196, C = 1024/2048) an NHWC path
    # with C as the lane axis would give fully dense stores, but only if that
    # layout already exists upstream (an extra HBM transpose would cost more).
    x3 = x.reshape(B, C, HW)

    # Memory-bound op: read + write x once, one sigmoid per channel.
    cost = pl.CostEstimate(flops=3 * B * C * HW,
                           transcendentals=B * C,
                           bytes_accessed=2 * B * C * HW * itemsize)

    # Per-core VMEM budget (v7x: 64 MiB/TC, v5e/v6e: 128 MiB), with headroom.
    try:
        vmem_cap = pltpu.get_tpu_info().vmem_capacity_bytes
    except Exception:
        vmem_cap = 64 << 20
    vmem_budget = max(vmem_cap - (16 << 20), 16 << 20)

    tile_bytes = C * HW * itemsize
    # 2x double-buffered input + output tiles + pooled/gate scratch + headroom.
    single_pass_need = 4 * tile_bytes + 64 * C * 4 + (2 << 20)
    use_single_pass = (single_pass_need <= vmem_budget
                       and not (B == 1 and tile_bytes >= (4 << 20)))

    if use_single_pass:
        out3 = pl.pallas_call(
            _single_pass_kernel(C, HW, pad, k_size),
            out_shape=jax.ShapeDtypeStruct((B, C, HW), x.dtype),
            grid_spec=pltpu.PrefetchScalarGridSpec(
                num_scalar_prefetch=0,
                grid=(B,),
                in_specs=[
                    pl.BlockSpec(memory_space=pltpu.MemorySpace.SMEM),  # conv taps
                    pl.BlockSpec((None, C, HW), lambda b: (b, 0, 0)),   # x tile
                ],
                out_specs=pl.BlockSpec((None, C, HW), lambda b: (b, 0, 0)),
            ),
            compiler_params=pltpu.CompilerParams(
                dimension_semantics=("parallel",),
                vmem_limit_bytes=int(min(max(single_pass_need, 8 << 20),
                                         vmem_budget)),
            ),
            cost_estimate=cost,
        )(w, x3)
        return out3.reshape(B, C, H, W)

    # ---- Two-pass fallback ------------------------------------------------
    hw_target = int(max(128, min(4096, (8 << 20) // max(C * itemsize, 1))))
    hw_blk = _pick_block(HW, target=hw_target, multiple=128)
    c_blk = _pick_block(C, target=512, multiple=8)
    n_hw = HW // hw_blk
    n_c = C // c_blk

    # Pass 1: spatially tiled pool -> channel conv -> sigmoid -> (B, C, 1) gate.
    gates = pl.pallas_call(
        _pool_gate_kernel(C, HW, pad, k_size),
        out_shape=jax.ShapeDtypeStruct((B, C, 1), jnp.float32),
        grid_spec=pltpu.PrefetchScalarGridSpec(
            num_scalar_prefetch=0,
            grid=(B, n_hw),
            in_specs=[
                pl.BlockSpec(memory_space=pltpu.MemorySpace.SMEM),
                pl.BlockSpec((None, C, hw_blk), lambda b, h: (b, 0, h)),
            ],
            out_specs=pl.BlockSpec((None, C, 1), lambda b, h: (b, 0, 0)),
            scratch_shapes=[pltpu.VMEM((C, 1), jnp.float32)],
        ),
        compiler_params=pltpu.CompilerParams(
            dimension_semantics=("parallel", "arbitrary"),
            vmem_limit_bytes=int(max(4 * C * hw_blk * itemsize + 16 * C * 4
                                     + (2 << 20), 8 << 20)),
        ),
        cost_estimate=pl.CostEstimate(flops=B * C * HW,
                                      transcendentals=B * C,
                                      bytes_accessed=B * C * HW * itemsize),
    )(w, x3)

    # Pass 2: gating multiply on a fully parallel (batch, C-block, HW-block) grid.
    out3 = pl.pallas_call(
        _gating_kernel,
        out_shape=jax.ShapeDtypeStruct((B, C, HW), x.dtype),
        grid_spec=pltpu.PrefetchScalarGridSpec(
            num_scalar_prefetch=0,
            grid=(B, n_c, n_hw),
            in_specs=[
                pl.BlockSpec((None, c_blk, hw_blk), lambda b, c, h: (b, c, h)),
                pl.BlockSpec((None, c_blk, 1), lambda b, c, h: (b, c, 0)),
            ],
            out_specs=pl.BlockSpec((None, c_blk, hw_blk), lambda b, c, h: (b, c, h)),
        ),
        compiler_params=pltpu.CompilerParams(
            dimension_semantics=("parallel", "parallel", "parallel"),
            vmem_limit_bytes=int(max(4 * c_blk * hw_blk * itemsize
                                     + 4 * c_blk * 4 + (2 << 20), 8 << 20)),
        ),
        cost_estimate=pl.CostEstimate(flops=B * C * HW,
                                      transcendentals=0,
                                      bytes_accessed=2 * B * C * HW * itemsize),
    )(x3, gates)
    return out3.reshape(B, C, H, W)


# ---------------------------------------------------------------------------
# Pure-JAX reference (mirrors the PyTorch forward exactly).
# ---------------------------------------------------------------------------
def eca_reference(x, conv_w, k_size=3):
    pad = (k_size - 1) // 2
    y = jnp.mean(x, axis=(2, 3))                       # AdaptiveAvgPool2d(1) -> (B, C)
    w = conv_w.reshape(k_size)
    C = y.shape[1]
    y_pad = jnp.pad(y, ((0, 0), (pad, pad)))
    y_conv = jnp.zeros_like(y)
    for t in range(k_size):
        y_conv = y_conv + w[t] * y_pad[:, t:t + C]
    s = jax.nn.sigmoid(y_conv)
    return x * s[:, :, None, None]


if __name__ == "__main__":
    key = jax.random.PRNGKey(0)
    kx, kw = jax.random.split(key)

    B, C, H, W = 2, 4, 16, 16
    k_size = 3

    x = jax.random.normal(kx, (B, C, H, W), dtype=jnp.float32)
    # Deterministic Conv1d weight, shape (out=1, in=1, k_size), no bias.
    conv_w = jax.random.normal(kw, (1, 1, k_size), dtype=jnp.float32) * 0.5

    out = eca_forward(x, conv_w, k_size=k_size)
    out = jax.block_until_ready(out)

    ref = eca_reference(x, conv_w, k_size=k_size)
    assert out.shape == (B, C, H, W)
    assert jnp.allclose(out, ref, atol=1e-4, rtol=1e-4), "mismatch vs reference"

    print("KERNEL_OK")
</pallas_src>

<mosaic_0001>
module attributes {stable_mosaic.version = 11 : i64} {
  func.func @kernel(%arg0: i32, %arg1: memref<3xf32, #tpu.memory_space<smem>>, %arg2: memref<1x4x256xf32, #tpu.memory_space<vmem>>, %arg3: memref<1x4x256xf32, #tpu.memory_space<vmem>>) attributes {dimension_semantics = [#tpu.dimension_semantics<parallel>], iteration_bounds = array<i64: 2>, scalar_prefetch = 0 : i64, scratch_operands = 0 : i64, tpu.core_type = #tpu.core_type<tc>, window_params = [{transform_indices = @transform_0, window_bounds = array<i64: 3>}, {transform_indices = @transform_1, window_bounds = array<i64: 1, 4, 256>}, {transform_indices = @transform_2, window_bounds = array<i64: 1, 4, 256>}]} {
    %c0 = arith.constant 0 : index
    %c0_0 = arith.constant 0 : index
    %c0_1 = arith.constant 0 : index
    %0 = vector.load %arg2[%c0, %c0_0, %c0_1] : memref<1x4x256xf32, #tpu.memory_space<vmem>>, vector<1x4x256xf32>
    %1 = vector.shape_cast %0 : vector<1x4x256xf32> to vector<4x256xf32>
    %cst = arith.constant dense<0.000000e+00> : vector<4xf32>
    %2 = vector.multi_reduction <add>, %1, %cst [1] : vector<4x256xf32> to vector<4xf32>
    %3 = vector.shape_cast %2 : vector<4xf32> to vector<4x1xf32>
    %cst_2 = arith.constant 3.906250e-03 : f32
    %4 = vector.broadcast %cst_2 : f32 to vector<4x1xf32>
    %5 = arith.mulf %3, %4 : vector<4x1xf32>
    %6 = tpu.iota {dimensions = array<i32: 0>} : vector<4x4xi32>
    %7 = tpu.iota {dimensions = array<i32: 1>} : vector<4x4xi32>
    %8 = arith.subi %6, %7 : vector<4x4xi32>
    %c1_i32 = arith.constant 1 : i32
    %9 = vector.broadcast %c1_i32 : i32 to vector<4x4xi32>
    %10 = arith.addi %8, %9 : vector<4x4xi32>
    %cst_3 = arith.constant 0.000000e+00 : f32
    %11 = vector.broadcast %cst_3 : f32 to vector<4x4xf32>
    %c0_i32 = arith.constant 0 : i32
    %12 = vector.broadcast %c0_i32 : i32 to vector<4x4xi32>
    %13 = arith.cmpi eq, %10, %12 : vector<4x4xi32>
    %c0_4 = arith.constant 0 : index
    %14 = memref.load %arg1[%c0_4] : memref<3xf32, #tpu.memory_space<smem>>
    %15 = vector.broadcast %14 : f32 to vector<4x4xf32>
    %16 = arith.select %13, %15, %11 : vector<4x4xi1>, vector<4x4xf32>
    %c1_i32_5 = arith.constant 1 : i32
    %17 = vector.broadcast %c1_i32_5 : i32 to vector<4x4xi32>
    %18 = arith.cmpi eq, %10, %17 : vector<4x4xi32>
    %c1 = arith.constant 1 : index
    %19 = memref.load %arg1[%c1] : memref<3xf32, #tpu.memory_space<smem>>
    %20 = vector.broadcast %19 : f32 to vector<4x4xf32>
    %21 = arith.select %18, %20, %16 : vector<4x4xi1>, vector<4x4xf32>
    %c2_i32 = arith.constant 2 : i32
    %22 = vector.broadcast %c2_i32 : i32 to vector<4x4xi32>
    %23 = arith.cmpi eq, %10, %22 : vector<4x4xi32>
    %c2 = arith.constant 2 : index
    %24 = memref.load %arg1[%c2] : memref<3xf32, #tpu.memory_space<smem>>
    %25 = vector.broadcast %24 : f32 to vector<4x4xf32>
    %26 = arith.select %23, %25, %21 : vector<4x4xi1>, vector<4x4xf32>
    %27 = vector.broadcast %5 : vector<4x1xf32> to vector<4x4xf32>
    %28 = arith.mulf %26, %27 : vector<4x4xf32>
    %cst_6 = arith.constant dense<0.000000e+00> : vector<4xf32>
    %29 = vector.multi_reduction <add>, %28, %cst_6 [0] : vector<4x4xf32> to vector<4xf32>
    %30 = vector.shape_cast %29 : vector<4xf32> to vector<1x4xf32>
    %31 = arith.negf %30 : vector<1x4xf32>
    %32 = math.exp %31 : vector<1x4xf32>
    %cst_7 = arith.constant 1.000000e+00 : f32
    %33 = vector.broadcast %cst_7 : f32 to vector<1x4xf32>
    %34 = arith.addf %33, %32 : vector<1x4xf32>
    %35 = arith.divf %33, %34 : vector<1x4xf32>
    %c1_i32_8 = arith.constant 1 : i32
    %36 = vector.broadcast %c1_i32_8 : i32 to vector<4x4xi32>
    %37 = arith.cmpi eq, %10, %36 : vector<4x4xi32>
    %cst_9 = arith.constant 0.000000e+00 : f32
    %38 = vector.shape_cast %35 : vector<1x4xf32> to vector<1x4xf32>
    %39 = vector.broadcast %38 : vector<1x4xf32> to vector<4x4xf32>
    %40 = vector.broadcast %cst_9 : f32 to vector<4x4xf32>
    %41 = arith.select %37, %39, %40 : vector<4x4xi1>, vector<4x4xf32>
    %cst_10 = arith.constant dense<0.000000e+00> : vector<4xf32>
    %42 = vector.multi_reduction <add>, %41, %cst_10 [1] : vector<4x4xf32> to vector<4xf32>
    %43 = vector.shape_cast %42 : vector<4xf32> to vector<4x1xf32>
    %44 = vector.broadcast %43 : vector<4x1xf32> to vector<4x256xf32>
    %45 = arith.mulf %1, %44 : vector<4x256xf32>
    %c0_11 = arith.constant 0 : index
    %c0_12 = arith.constant 0 : index
    %c0_13 = arith.constant 0 : index
    %46 = vector.load %arg3[%c0_11, %c0_12, %c0_13] : memref<1x4x256xf32, #tpu.memory_space<vmem>>, vector<1x4x256xf32>
    %47 = vector.shape_cast %46 : vector<1x4x256xf32> to vector<4x256xf32>
    %48 = vector.shape_cast %45 : vector<4x256xf32> to vector<1x4x256xf32>
    tpu.vector_store %arg3[%c0_11, %c0_12, %c0_13], %48 {strides = array<i32>} : memref<1x4x256xf32, #tpu.memory_space<vmem>>, vector<1x4x256xf32>,
    return
  }
  func.func @transform_0(%arg0: i32) -> i32 {
    %c0_i32 = arith.constant 0 : i32
    %c0_i32_0 = arith.constant 0 : i32
    return %c0_i32 : i32
  }
  func.func @transform_1(%arg0: i32) -> (i32, i32, i32) {
    %c0_i32 = arith.constant 0 : i32
    %c0_i32_0 = arith.constant 0 : i32
    %c0_i32_1 = arith.constant 0 : i32
    return %arg0, %c0_i32, %c0_i32_0 : i32, i32, i32
  }
  func.func @transform_2(%arg0: i32) -> (i32, i32, i32) {
    %c0_i32 = arith.constant 0 : i32
    %c0_i32_0 = arith.constant 0 : i32
    %c0_i32_1 = arith.constant 0 : i32
    return %arg0, %c0_i32, %c0_i32_0 : i32, i32, i32
  }
}

</mosaic_0001>

<llo_original>
// kernel: tpu_custom_call.1
$region0: #{tpu_custom_call.1}
  #allocation0 [shape = 'u32[]', space=smem, size = 0x4, offset = 0x4, fixed_abs, tag = 'smem constant byte address 0x4 - core index']
  #allocation1 [shape = 'u32[72,128]{1,0:T(1,128)}', space=vmem, size = 0x9000, scoped, tag = 'internal scratch']
  %s0 = inlined_call_operand.hbm [shape: f32[3], index: 0, kind: input, shape index: {}]
  %s1 = inlined_call_operand.hbm [shape: f32[2,4,256], index: 1, kind: input, shape index: {}]
  %s2 = inlined_call_operand.hbm [shape: f32[2,4,256], index: 2, kind: output, shape index: {}]
  %s3 = sld [smem:[#allocation0]]
  $region49: #{tpu_custom_call.1} parent=0
    _
  %s5 = ssub.s32 1, %s3
  %s6 = scalar_select 0, %s5, %s3
  $region1: #{tpu_custom_call.1} parent=0
    #allocation2 [shape = 'u8[512]{0}', space=smem, size = 0x200, scoped, tag = 'input window, operand 0, single buffered']
    #allocation3 [shape = 's32[2]{0}', space=sflag, size = 0x8, scoped, tag = 'scoped memory for tpu_custom_call.1']
    #allocation4 [shape = 's32[2]{0}', space=sflag, size = 0x8, scoped, tag = 'scoped memory for tpu_custom_call.1']
    #allocation5 [shape = 's32[2]{0}', space=sflag, size = 0x8, scoped, tag = 'scoped memory for tpu_custom_call.1']
    #allocation6 [shape = 'u8[8192]{0}', space=vmem, size = 0x2000, scoped, tag = 'input window, operand 1']
    #allocation7 [shape = 'u8[8192]{0}', space=vmem, size = 0x2000, scoped, tag = 'output window, operand 0']
    %7 = vsyncpa [#allocation5], 0
    %8 = vsyncpa [#allocation3], 0
    %s9 = scalar_lea.sflag [#allocation3], 1
    %10 = vsyncpa %s9, 0
    %11 = vsyncpa [#allocation4], 0
    %s12 = scalar_lea.sflag [#allocation4], 1
    %13 = vsyncpa %s12, 0
    loop: start=0, step=1, limit=4
    $region2: #{tpu_custom_call.1} parent=1 // loop_pre_header
      _
    $region3: #{tpu_custom_call.1} parent=1 // loop_header
      %s15 = sphi 0, %s19
      %p16 = scmp.ge.s32.totalorder %s15, 4
      %s23 = sphi 0, %s23
      %s25 = sphi 0, %s23
      %s26 = sphi 0, %s25
      %s40 = sphi 0, %s26
      %s46 = sphi 0, %s48
      %s49 = sphi 0, %s46
      %s50 = sphi 0, %s49
      %s66 = sphi 0, %s50
      %s72 = sphi 0, %s74
      %s75 = sphi 0, %s72
      %s76 = sphi 0, %s75
      %s92 = sphi 0, %s76
    $region4: #{tpu_custom_call.1} parent=1 // loop_header_branch
      %18 = sbr.rel (%p16) target = $region8
    $region5: #{tpu_custom_call.1} parent=1 // loop_body
      %s20 = ssub.s32 %s15, 1
      %s21 = ssub.s32 %s15, 2
      %s22 = sadd.s32 %s15, 1
      %s24 = sadd.s32 %s23, 1
      %p27 = scmp.eq.s32.totalorder %s15, 1
      %p28 = scmp.ne.s32.totalorder %s23, %s25
      %p29 = scmp.eq.s32.totalorder %s15, 0
      %p30 = por %p28, %p29
      %p31 = scmp.ne.s32.totalorder %s23, %s25
      %p32 = scmp.eq.s32.totalorder %s20, 1
      %p33 = por %p31, %p32
      %p34 = scmp.ne.s32.totalorder %s25, %s26
      %p35 = scmp.eq.s32.totalorder %s20, 0
      %p36 = por %p34, %p35
      %p37 = scmp.ne.s32.totalorder %s25, %s26
      %p38 = scmp.eq.s32.totalorder %s21, 1
      %p39 = por %p37, %p38
      %p41 = scmp.ne.s32.totalorder %s26, %s40
      %p42 = scmp.eq.s32.totalorder %s21, 0
      %p43 = por %p41, %p42
      %s44 = ssub.s32 %s15, %s22
      %p45 = scmp.eq.s32.totalorder %s44, 0
      %s47 = sadd.s32 %s46, 1
      %s48 = scalar_select %p45, %s46, %s47
      %p51 = pneg %p45
      %p52 = scmp.eq.s32.totalorder %s15, 1
      %p53 = por %p51, %p52
      %p54 = scmp.ne.s32.totalorder %s46, %s49
      %p55 = scmp.eq.s32.totalorder %s15, 0
      %p56 = por %p54, %p55
      %p57 = scmp.ne.s32.totalorder %s46, %s49
      %p58 = scmp.eq.s32.totalorder %s20, 1
      %p59 = por %p57, %p58
      %p60 = scmp.ne.s32.totalorder %s49, %s50
      %p61 = scmp.eq.s32.totalorder %s20, 0
      %p62 = por %p60, %p61
      %p63 = scmp.ne.s32.totalorder %s49, %s50
      %p64 = scmp.eq.s32.totalorder %s21, 1
      %p65 = por %p63, %p64
      %p67 = scmp.ne.s32.totalorder %s50, %s66
      %p68 = scmp.eq.s32.totalorder %s21, 0
      %p69 = por %p67, %p68
      %s70 = ssub.s32 %s15, %s22
      %p71 = scmp.eq.s32.totalorder %s70, 0
      %s73 = sadd.s32 %s72, 1
      %s74 = scalar_select %p71, %s72, %s73
      %p77 = pneg %p71
      %p78 = scmp.eq.s32.totalorder %s15, 1
      %p79 = por %p77, %p78
      %p80 = scmp.ne.s32.totalorder %s72, %s75
      %p81 = scmp.eq.s32.totalorder %s15, 0
      %p82 = por %p80, %p81
      %p83 = scmp.ne.s32.totalorder %s72, %s75
      %p84 = scmp.eq.s32.totalorder %s20, 1
      %p85 = por %p83, %p84
      %p86 = scmp.ne.s32.totalorder %s75, %s76
      %p87 = scmp.eq.s32.totalorder %s20, 0
      %p88 = por %p86, %p87
      %p89 = scmp.ne.s32.totalorder %s75, %s76
      %p90 = scmp.eq.s32.totalorder %s21, 1
      %p91 = por %p89, %p90
      %p93 = scmp.ne.s32.totalorder %s76, %s92
      %p94 = scmp.eq.s32.totalorder %s21, 0
      %p95 = por %p93, %p94
      %p96 = scmp.le.s32.totalorder 1, %s15
      %p97 = scmp.lt.s32.totalorder %s15, 3
      %p98 = pnand %p96, %p97
      %p99 = pneg %p98
      // Predicated region
      $region9: #{tpu_custom_call.1} parent=5 // pred_check
        _
      $region10: #{tpu_custom_call.1} parent=5 // pred_check_branch
        %101 = sbr.rel (%p98) target = $region12
      $region11: #{tpu_custom_call.1} parent=5 // pred_region
        %s102 = ssub.s32 %s15, 1
        // Predicated region
        $region13: #{tpu_custom_call.1} parent=11 // pred_check
          %p103 = pneg %p36
        $region14: #{tpu_custom_call.1} parent=11 // pred_check_branch
          %105 = sbr.rel (%p103) target = $region16
        $region15: #{tpu_custom_call.1} parent=11 // pred_region
          %107 = vsyncadd [#allocation5], 0
          %s109 = sshll.u32 %s0, 4
          %s110 = int_to_ptr.hbm [resolvable:$true] %s109
          %112 = dma.hbm_to_smem %s110, 16, [#allocation2], [#allocation5]
        $region16: #{tpu_custom_call.1} parent=11 // pred_fallthru
          _
      $region12: #{tpu_custom_call.1} parent=5 // pred_fallthru
        _
      %p113 = scmp.lt.s32.totalorder %s15, 2
      // Predicated region
      $region17: #{tpu_custom_call.1} parent=5 // pred_check
        %p114 = pneg %p113
      $region18: #{tpu_custom_call.1} parent=5 // pred_check_branch
        %116 = sbr.rel (%p114) target = $region20
      $region19: #{tpu_custom_call.1} parent=5 // pred_region
        // Predicated region
        $region21: #{tpu_custom_call.1} parent=19 // pred_check
          %p117 = pneg %p56
        $region22: #{tpu_custom_call.1} parent=19 // pred_check_branch
          %119 = sbr.rel (%p117) target = $region24
        $region23: #{tpu_custom_call.1} parent=19 // pred_region
          %s120 = sand.u32 %s46, 1
          %s121 = scalar_lea.sflag [#allocation3], %s120
          %s122 = sand.u32 %s46, 1
          %s123 = smul.addr %s122, 8
          %s124 = scalar_lea.vmem [#allocation6], %s123
          %126 = vsyncadd %s121, 0
          %s127 = smul.addr %s15, 2
          %s128 = smul.addr %s127, 4
          %s129 = scalar_lea.hbm %s1, %s128
          %s131 = sshll.u32 %s129, 4
          %s132 = int_to_ptr.hbm [resolvable:$true] %s131
          %s133 = sshll.u32 %s124, 4
          %s134 = int_to_ptr.vmem [resolvable:$true] %s133
          %136 = dma.hbm_to_vmem [thread:$0]  %s132, 128, %s134, %s121
        $region24: #{tpu_custom_call.1} parent=19 // pred_fallthru
          _
      $region20: #{tpu_custom_call.1} parent=5 // pred_fallthru
        _
      %p137 = scmp.le.s32.totalorder 1, %s15
      %p138 = scmp.lt.s32.totalorder %s15, 3
      %p139 = pnand %p137, %p138
      %p140 = pneg %p139
      // Predicated region
      $region25: #{tpu_custom_call.1} parent=5 // pred_check
        _
      $region26: #{tpu_custom_call.1} parent=5 // pred_check_branch
        %142 = sbr.rel (%p139) target = $region28
      $region27: #{tpu_custom_call.1} parent=5 // pred_region
        %s143 = ssub.s32 %s15, 1
        // Predicated region
        $region29: #{tpu_custom_call.1} parent=27 // pred_check
          %p144 = pneg %p36
        $region30: #{tpu_custom_call.1} parent=27 // pred_check_branch
          %146 = sbr.rel (%p144) target = $region32
        $region31: #{tpu_custom_call.1} parent=27 // pred_region
          %148 = dma.done [#allocation5], 16
        $region32: #{tpu_custom_call.1} parent=27 // pred_fallthru
          _
        %s149 = sand.u32 %s49, 1
        %s150 = scalar_lea.sflag [#allocation3], %s149
        %s151 = sand.u32 %s49, 1
        %s152 = smul.addr %s151, 8
        %s153 = scalar_lea.vmem [#allocation6], %s152
        // Predicated region
        $region33: #{tpu_custom_call.1} parent=27 // pred_check
          %p154 = pneg %p62
        $region34: #{tpu_custom_call.1} parent=27 // pred_check_branch
          %156 = sbr.rel (%p154) target = $region36
        $region35: #{tpu_custom_call.1} parent=27 // pred_region
          %158 = dma.done %s150, 128
        $region36: #{tpu_custom_call.1} parent=27 // pred_fallthru
          _
        %159 = sfence
        %p160 = pneg %p36
        %p161 = pneg %p33
        %s162 = sand.u32 %s49, 1
        %s163 = scalar_lea.sflag [#allocation3], %s162
        %s164 = sand.u32 %s49, 1
        %s165 = smul.addr %s164, 8
        %s166 = scalar_lea.vmem [#allocation6], %s165
        %p167 = pneg %p62
        %p168 = pneg %p59
        %p169 = pneg %p88
        %p170 = pneg %p85
        %s171 = sand.u32 %s75, 1
        %s172 = scalar_lea.sflag [#allocation4], %s171
        %s173 = sand.u32 %s75, 1
        %s174 = smul.addr %s173, 8
        %s175 = scalar_lea.vmem [#allocation7], %s174
        %v176 = vld [vmem:[%s153] sm:$0xff]
        %178 = vst [vmem:[#allocation1] ss:$2 sm:$0xff] %v176
        %v179 = vld.sshfl [vmem:[#allocation1] sm:$0xff pattern:$0x75316420]
        %v180 = vld.sshfl [vmem:[#allocation1 + $0x8] sm:$0xff pattern:$0x75316420]
        %vm183 = vcmask 1043456
        %v184 = vsel %vm183, %v179, 0.0
        %v185 = vsel %vm183, %v180, 0.0
        %v186 = vadd.f32 %v184, %v185
        %187 = vadd.xlane.f32.xlu0 %v186
        %v188 = vpop.xlane.xlu0 %187
        %v189 = vmul.f32 %v188, 0.00390625
        %v190 = vlaneseq
        %v191 = vshrl.u32 %v190, 7
        %v192 = vlaneseq
        %v193 = vand.u32 %v192, 127
        %v194 = vsub.s32 %v191, %v193
        %v195 = vadd.s32 %v194, 1
        %vm196 = vcmp.eq.s32.totalorder %v195, 0
        %s197 = sld [smem:[#allocation2]]
        %v198 = vstv %s197
        %v199 = vsel %vm196, %v198, 0.0
        %vm200 = vcmp.eq.s32.totalorder %v195, 1
        %s201 = sld [smem:[#allocation2 + $0x1]]
        %v202 = vstv %s201
        %v203 = vsel %vm200, %v202, %v199
        %vm204 = vcmp.eq.s32.totalorder %v195, 2
        %s205 = sld [smem:[#allocation2 + $0x2]]
        %v206 = vstv %s205
        %v207 = vsel %vm204, %v206, %v203
        %v208 = vmul.f32 %v207, %v189
        %vm209 = vcmask 27648
        %v210 = vsel %vm209, %v208, 0.0
        %v211 = vrot.slane %v210, 4
        %v212 = vadd.f32 %v210, %v211
        %v213 = vrot.slane %v212, 2
        %v214 = vadd.f32 %v212, %v213
        %v215 = vrot.slane %v214, 1
        %v216 = vadd.f32 %v214, %v215
        %v217 = vxor.u32 %v216, 2147483648
        %v218 = vmul.f32 %v217, 1.442695
        %v219 = vpow.pop %v218
        %v220 = vadd.f32 %v219, 1.0
        %v221 = vrcp.pop %v220
        %v222 = vmul.f32 %v220, %v221
        %v223 = vsub.f32 1.0, %v222
        %v224 = vmul.f32 %v221, %v223
        %v225 = vadd.f32 %v221, %v224
        %vm226 = vweird.f32 %v220
        %vm227 = vweird.f32 %v221
        %vm228 = vmor %vm226, %vm227
        %v229 = vsel %vm228, %v221, %v225
        %v230 = vand.u32 2147483647, %v220
        %vm231 = vcmp.eq.f32.partialorder %v230, 8.507059e+37
        %v232 = vand.u32 %v220, 2147483648
        %v233 = vor.u32 1.1754944e-38, %v232
        %v234 = vsel %vm231, %v233, %v229
        %v235 = vmul.f32 1.0, %v234
        %v236 = vsel %vm200, %v235, 0.0
        %v237 = vsel %vm209, %v236, 0.0
        %238 = vadd.xlane.f32.xlu0 %v237
        %v239 = vpop.xlane.xlu0 %238
        %v242 = vunpack.c.l.s4 839922192
        %v243 = vunpack.c.0.s8 %v242
        %v244 = vperm.slane %v239, %v243
        %v246 = vmul.f32 %v176, %v244
        %247 = vst [vmem:[%s175] sm:$0xff] %v246
        %s248 = sand.u32 %s75, 1
        %s249 = scalar_lea.sflag [#allocation4], %s248
        %s250 = sand.u32 %s75, 1
        %s251 = smul.addr %s250, 8
        %s252 = scalar_lea.vmem [#allocation7], %s251
        // Predicated region
        $region37: #{tpu_custom_call.1} parent=27 // pred_check
          %p253 = pneg %p85
        $region38: #{tpu_custom_call.1} parent=27 // pred_check_branch
          %255 = sbr.rel (%p253) target = $region40
        $region39: #{tpu_custom_call.1} parent=27 // pred_region
          %257 = vsyncadd %s249, 0
          %s258 = smul.addr %s20, 2
          %s259 = smul.addr %s258, 4
          %s260 = scalar_lea.hbm %s2, %s259
          %s262 = sshll.u32 %s252, 4
          %s263 = int_to_ptr.vmem [resolvable:$true] %s262
          %s264 = sshll.u32 %s260, 4
          %s265 = int_to_ptr.hbm [resolvable:$true] %s264
          %267 = dma.vmem_to_hbm [thread:$0]  %s263, 128, %s265, %s249
        $region40: #{tpu_custom_call.1} parent=27 // pred_fallthru
          _
      $region28: #{tpu_custom_call.1} parent=5 // pred_fallthru
        _
      %p268 = scmp.le.s32.totalorder 2, %s15
      // Predicated region
      $region41: #{tpu_custom_call.1} parent=5 // pred_check
        %p269 = pneg %p268
      $region42: #{tpu_custom_call.1} parent=5 // pred_check_branch
        %271 = sbr.rel (%p269) target = $region44
      $region43: #{tpu_custom_call.1} parent=5 // pred_region
        %s272 = ssub.s32 %s15, 2
        // Predicated region
        $region45: #{tpu_custom_call.1} parent=43 // pred_check
          %p273 = pneg %p91
        $region46: #{tpu_custom_call.1} parent=43 // pred_check_branch
          %275 = sbr.rel (%p273) target = $region48
        $region47: #{tpu_custom_call.1} parent=43 // pred_region
          %s276 = sand.u32 %s76, 1
          %s277 = scalar_lea.sflag [#allocation4], %s276
          %s278 = sand.u32 %s76, 1
          %s279 = smul.addr %s278, 8
          %s280 = scalar_lea.vmem [#allocation7], %s279
          %282 = dma.done %s277, 128
        $region48: #{tpu_custom_call.1} parent=43 // pred_fallthru
          _
      $region44: #{tpu_custom_call.1} parent=5 // pred_fallthru
        _
    $region6: #{tpu_custom_call.1} parent=1 // loop_footer
      %s19 = sadd.s32 1, %s15
    $region7: #{tpu_custom_call.1} parent=1 // loop_footer_branch
      %14 = sbr.rel target = $region3
    $region8: #{tpu_custom_call.1} parent=1 // loop_exit
      _
    %283 = vsyncpa [#allocation3], 1
    %s284 = scalar_lea.sflag [#allocation3], 1
    %285 = vsyncpa %s284, 1
    %286 = vsyncpa [#allocation4], 1
    %s287 = scalar_lea.sflag [#allocation4], 1
    %288 = vsyncpa %s287, 1
    %289 = vsyncpa [#allocation5], 1
    %s290 = scalar_lea.sflag [#allocation5], 1
    %291 = vsyncpa %s290, 1

</llo_original>
